<compile_context>
chip_gen: v5e
topology: v5e:2x2
jax: 0.10.0
libtpu: 0.0.40
codegen_flags: <defaults>
</compile_context>

<pallas_src>
import jax
import jax.numpy as jnp
from jax.experimental import pallas as pl
from jax.experimental.pallas import tpu as pltpu

LANE = 128      # lane width  (last-dim alignment)
SUBLANE = 8     # sublane width (second-to-last-dim alignment)


def _round_up(n, m):
    return (n + m - 1) // m * m


def _pad2d(a, rows, cols):
    out = jnp.zeros((rows, cols), a.dtype)
    return out.at[: a.shape[0], : a.shape[1]].set(a)


def dqn_kernel(x_ref, w1_ref, b1_ref, w2_ref, b2_ref, w3_ref, b3_ref, out_ref):
    """One (TB, SP) batch tile through the fused 3-layer MLP."""
    x = x_ref[...]                                            # (TB, SP) f32

    h1 = jnp.dot(x.astype(jnp.bfloat16), w1_ref[...],
                 preferred_element_type=jnp.float32) + b1_ref[...]
    h1 = jnp.maximum(h1, 0.0)

    h2 = jnp.dot(h1.astype(jnp.bfloat16), w2_ref[...],
                 preferred_element_type=jnp.float32) + b2_ref[...]
    h2 = jnp.maximum(h2, 0.0)

    q = jnp.dot(h2.astype(jnp.bfloat16), w3_ref[...],
                preferred_element_type=jnp.float32) + b3_ref[...]
    out_ref[...] = q                                          # f32, lane-dense


def dqn_forward(x, params, *, block_b=512):
    """x: (B, state_size) f32. params: dict w1,b1,w2,b2,w3,b3 in (in,out) layout."""
    w1, b1 = params["w1"], params["b1"]
    w2, b2 = params["w2"], params["b2"]
    w3, b3 = params["w3"], params["b3"]

    state_size, h1_size = w1.shape
    h2_size = w2.shape[1]
    action_size = w3.shape[1]
    B = x.shape[0]

    # Lane-dense (padded) feature sizes.
    SP = _round_up(state_size, LANE)
    H1 = _round_up(h1_size, LANE)
    H2 = _round_up(h2_size, LANE)
    AP = _round_up(action_size, LANE)

    # Batch tile: big (default 512 rows) but shrunk for tiny batches.
    TB = _round_up(min(block_b, _round_up(B, SUBLANE)), SUBLANE)
    BP = _round_up(B, TB)
    grid = (BP // TB,)

    # Zero-padded, lane-dense operands; weights cast once to bf16 here.
    xp = jnp.zeros((BP, SP), jnp.float32).at[:B, :state_size].set(
        x.astype(jnp.float32))
    w1p = _pad2d(w1, SP, H1).astype(jnp.bfloat16)
    w2p = _pad2d(w2, H1, H2).astype(jnp.bfloat16)
    w3p = _pad2d(w3, H2, AP).astype(jnp.bfloat16)
    b1p = _pad2d(b1.reshape(1, -1), 1, H1).astype(jnp.float32)
    b2p = _pad2d(b2.reshape(1, -1), 1, H2).astype(jnp.float32)
    b3p = _pad2d(b3.reshape(1, -1), 1, AP).astype(jnp.float32)

    flops = 2 * BP * (SP * H1 + H1 * H2 + H2 * AP)
    bytes_accessed = (xp.size * 4 + BP * AP * 4
                      + (w1p.size + w2p.size + w3p.size) * 2
                      + (b1p.size + b2p.size + b3p.size) * 4)

    resident = lambda i: (0, 0)      # weights/biases: same block every grid step
    out_padded = pl.pallas_call(
        dqn_kernel,
        out_shape=jax.ShapeDtypeStruct((BP, AP), jnp.float32),
        grid_spec=pltpu.PrefetchScalarGridSpec(
            num_scalar_prefetch=0,
            grid=grid,
            in_specs=[
                pl.BlockSpec((TB, SP), lambda i: (i, 0)),     # x: batch-tiled
                pl.BlockSpec((SP, H1), resident),
                pl.BlockSpec((1, H1), resident),
                pl.BlockSpec((H1, H2), resident),
                pl.BlockSpec((1, H2), resident),
                pl.BlockSpec((H2, AP), resident),
                pl.BlockSpec((1, AP), resident),
            ],
            out_specs=pl.BlockSpec((TB, AP), lambda i: (i, 0)),
        ),
        compiler_params=pltpu.CompilerParams(
            dimension_semantics=("parallel",)),
        cost_estimate=pl.CostEstimate(
            flops=flops, transcendentals=0, bytes_accessed=bytes_accessed),
    )(xp, w1p, b1p, w2p, b2p, w3p, b3p)

    return out_padded[:B, :action_size]


def init_params(state_size, action_size, hidden=64, seed=0):
    """Deterministic synthetic init (matches nn.Linear shapes, not a checkpoint)."""
    key = jax.random.PRNGKey(seed)
    ks = jax.random.split(key, 6)

    def linear(kw, kb, fan_in, fan_out):
        bound = 1.0 / jnp.sqrt(jnp.float32(fan_in))
        # stored as (in, out) so the kernel computes x @ W (== PyTorch x @ W.T)
        w = jax.random.uniform(kw, (fan_in, fan_out), jnp.float32, -bound, bound)
        b = jax.random.uniform(kb, (1, fan_out), jnp.float32, -bound, bound)
        return w, b

    w1, b1 = linear(ks[0], ks[1], state_size, hidden)
    w2, b2 = linear(ks[2], ks[3], hidden, hidden)
    w3, b3 = linear(ks[4], ks[5], hidden, action_size)
    return dict(w1=w1, b1=b1, w2=w2, b2=b2, w3=w3, b3=b3)


def dqn_forward_ref(x, p):
    """JAX reference with matching bf16-operand / f32-accumulate numerics."""
    def lin(a, w, b):
        return jnp.dot(a.astype(jnp.bfloat16), w.astype(jnp.bfloat16),
                       preferred_element_type=jnp.float32) + b
    h1 = jnp.maximum(lin(x, p["w1"], p["b1"]), 0.0)
    h2 = jnp.maximum(lin(h1, p["w2"], p["b2"]), 0.0)
    return lin(h2, p["w3"], p["b3"])


def dqn_forward_ref_f32(x, p):
    h1 = jnp.maximum(x @ p["w1"] + p["b1"], 0.0)
    h2 = jnp.maximum(h1 @ p["w2"] + p["b2"], 0.0)
    return h2 @ p["w3"] + p["b3"]


if __name__ == "__main__":
    batch = 8
    state_size = 16
    action_size = 4

    key = jax.random.PRNGKey(0)
    x = jax.random.normal(key, (batch, state_size), jnp.float32)
    params = init_params(state_size, action_size, hidden=64, seed=0)

    fwd = jax.jit(dqn_forward)
    out = jax.block_until_ready(fwd(x, params))
    ref_bf16 = jax.block_until_ready(dqn_forward_ref(x, params))
    ref_f32 = jax.block_until_ready(dqn_forward_ref_f32(x, params))

    assert out.shape == (batch, action_size), out.shape
    assert jnp.allclose(out, ref_bf16, atol=1e-3, rtol=1e-3), \
        "mismatch vs bf16-matched JAX reference"
    assert jnp.allclose(out, ref_f32, atol=5e-2, rtol=5e-2), \
        "mismatch vs f32 JAX reference"
    print("KERNEL_OK")
</pallas_src>

<mosaic_0001>
module attributes {stable_mosaic.version = 11 : i64} {
  func.func @dqn_kernel(%arg0: i32, %arg1: memref<8x128xf32, #tpu.memory_space<vmem>>, %arg2: memref<128x128xbf16, #tpu.memory_space<vmem>>, %arg3: memref<1x128xf32, #tpu.memory_space<vmem>>, %arg4: memref<128x128xbf16, #tpu.memory_space<vmem>>, %arg5: memref<1x128xf32, #tpu.memory_space<vmem>>, %arg6: memref<128x128xbf16, #tpu.memory_space<vmem>>, %arg7: memref<1x128xf32, #tpu.memory_space<vmem>>, %arg8: memref<8x128xf32, #tpu.memory_space<vmem>>) attributes {dimension_semantics = [#tpu.dimension_semantics<parallel>], iteration_bounds = array<i64: 1>, scalar_prefetch = 0 : i64, scratch_operands = 0 : i64, tpu.core_type = #tpu.core_type<tc>, window_params = [{transform_indices = @transform_0, window_bounds = array<i64: 8, 128>}, {pipeline_mode = #tpu.pipeline_mode<synchronous>, transform_indices = @transform_1, window_bounds = array<i64: 128, 128>}, {pipeline_mode = #tpu.pipeline_mode<synchronous>, transform_indices = @transform_2, window_bounds = array<i64: 1, 128>}, {pipeline_mode = #tpu.pipeline_mode<synchronous>, transform_indices = @transform_3, window_bounds = array<i64: 128, 128>}, {pipeline_mode = #tpu.pipeline_mode<synchronous>, transform_indices = @transform_4, window_bounds = array<i64: 1, 128>}, {pipeline_mode = #tpu.pipeline_mode<synchronous>, transform_indices = @transform_5, window_bounds = array<i64: 128, 128>}, {pipeline_mode = #tpu.pipeline_mode<synchronous>, transform_indices = @transform_6, window_bounds = array<i64: 1, 128>}, {transform_indices = @transform_7, window_bounds = array<i64: 8, 128>}]} {
    %c0 = arith.constant 0 : index
    %c0_0 = arith.constant 0 : index
    %0 = vector.load %arg1[%c0, %c0_0] : memref<8x128xf32, #tpu.memory_space<vmem>>, vector<8x128xf32>
    %1 = arith.truncf %0 : vector<8x128xf32> to vector<8x128xbf16>
    %c0_1 = arith.constant 0 : index
    %c0_2 = arith.constant 0 : index
    %2 = vector.load %arg2[%c0_1, %c0_2] : memref<128x128xbf16, #tpu.memory_space<vmem>>, vector<128x128xbf16>
    %cst = arith.constant dense<0.000000e+00> : vector<8x128xf32>
    %3 = tpu.matmul %1, %2, %cst {dimension_numbers = #tpu.dot_dimension_numbers<[1], [0], [0], [1], [0, 0, 1, 1], [], []>} : vector<8x128xbf16>, vector<128x128xbf16>, vector<8x128xf32> -> vector<8x128xf32>
    %c0_3 = arith.constant 0 : index
    %c0_4 = arith.constant 0 : index
    %4 = vector.load %arg3[%c0_3, %c0_4] : memref<1x128xf32, #tpu.memory_space<vmem>>, vector<1x128xf32>
    %5 = vector.broadcast %4 : vector<1x128xf32> to vector<8x128xf32>
    %6 = arith.addf %3, %5 : vector<8x128xf32>
    %cst_5 = arith.constant 0.000000e+00 : f32
    %7 = vector.broadcast %cst_5 : f32 to vector<8x128xf32>
    %8 = arith.maximumf %6, %7 : vector<8x128xf32>
    %9 = arith.truncf %8 : vector<8x128xf32> to vector<8x128xbf16>
    %c0_6 = arith.constant 0 : index
    %c0_7 = arith.constant 0 : index
    %10 = vector.load %arg4[%c0_6, %c0_7] : memref<128x128xbf16, #tpu.memory_space<vmem>>, vector<128x128xbf16>
    %cst_8 = arith.constant dense<0.000000e+00> : vector<8x128xf32>
    %11 = tpu.matmul %9, %10, %cst_8 {dimension_numbers = #tpu.dot_dimension_numbers<[1], [0], [0], [1], [0, 0, 1, 1], [], []>} : vector<8x128xbf16>, vector<128x128xbf16>, vector<8x128xf32> -> vector<8x128xf32>
    %c0_9 = arith.constant 0 : index
    %c0_10 = arith.constant 0 : index
    %12 = vector.load %arg5[%c0_9, %c0_10] : memref<1x128xf32, #tpu.memory_space<vmem>>, vector<1x128xf32>
    %13 = vector.broadcast %12 : vector<1x128xf32> to vector<8x128xf32>
    %14 = arith.addf %11, %13 : vector<8x128xf32>
    %cst_11 = arith.constant 0.000000e+00 : f32
    %15 = vector.broadcast %cst_11 : f32 to vector<8x128xf32>
    %16 = arith.maximumf %14, %15 : vector<8x128xf32>
    %17 = arith.truncf %16 : vector<8x128xf32> to vector<8x128xbf16>
    %c0_12 = arith.constant 0 : index
    %c0_13 = arith.constant 0 : index
    %18 = vector.load %arg6[%c0_12, %c0_13] : memref<128x128xbf16, #tpu.memory_space<vmem>>, vector<128x128xbf16>
    %cst_14 = arith.constant dense<0.000000e+00> : vector<8x128xf32>
    %19 = tpu.matmul %17, %18, %cst_14 {dimension_numbers = #tpu.dot_dimension_numbers<[1], [0], [0], [1], [0, 0, 1, 1], [], []>} : vector<8x128xbf16>, vector<128x128xbf16>, vector<8x128xf32> -> vector<8x128xf32>
    %c0_15 = arith.constant 0 : index
    %c0_16 = arith.constant 0 : index
    %20 = vector.load %arg7[%c0_15, %c0_16] : memref<1x128xf32, #tpu.memory_space<vmem>>, vector<1x128xf32>
    %21 = vector.broadcast %20 : vector<1x128xf32> to vector<8x128xf32>
    %22 = arith.addf %19, %21 : vector<8x128xf32>
    %c0_17 = arith.constant 0 : index
    %c0_18 = arith.constant 0 : index
    %23 = vector.load %arg8[%c0_17, %c0_18] : memref<8x128xf32, #tpu.memory_space<vmem>>, vector<8x128xf32>
    tpu.vector_store %arg8[%c0_17, %c0_18], %22 {strides = array<i32>} : memref<8x128xf32, #tpu.memory_space<vmem>>, vector<8x128xf32>,
    return
  }
  func.func @transform_0(%arg0: i32) -> (i32, i32) {
    %c0_i32 = arith.constant 0 : i32
    %c0_i32_0 = arith.constant 0 : i32
    return %arg0, %c0_i32 : i32, i32
  }
  func.func @transform_1(%arg0: i32) -> (i32, i32) {
    %c0_i32 = arith.constant 0 : i32
    %c0_i32_0 = arith.constant 0 : i32
    %c0_i32_1 = arith.constant 0 : i32
    return %c0_i32, %c0_i32_0 : i32, i32
  }
  func.func @transform_2(%arg0: i32) -> (i32, i32) {
    %c0_i32 = arith.constant 0 : i32
    %c0_i32_0 = arith.constant 0 : i32
    %c0_i32_1 = arith.constant 0 : i32
    return %c0_i32, %c0_i32_0 : i32, i32
  }
  func.func @transform_3(%arg0: i32) -> (i32, i32) {
    %c0_i32 = arith.constant 0 : i32
    %c0_i32_0 = arith.constant 0 : i32
    %c0_i32_1 = arith.constant 0 : i32
    return %c0_i32, %c0_i32_0 : i32, i32
  }
  func.func @transform_4(%arg0: i32) -> (i32, i32) {
    %c0_i32 = arith.constant 0 : i32
    %c0_i32_0 = arith.constant 0 : i32
    %c0_i32_1 = arith.constant 0 : i32
    return %c0_i32, %c0_i32_0 : i32, i32
  }
  func.func @transform_5(%arg0: i32) -> (i32, i32) {
    %c0_i32 = arith.constant 0 : i32
    %c0_i32_0 = arith.constant 0 : i32
    %c0_i32_1 = arith.constant 0 : i32
    return %c0_i32, %c0_i32_0 : i32, i32
  }
  func.func @transform_6(%arg0: i32) -> (i32, i32) {
    %c0_i32 = arith.constant 0 : i32
    %c0_i32_0 = arith.constant 0 : i32
    %c0_i32_1 = arith.constant 0 : i32
    return %c0_i32, %c0_i32_0 : i32, i32
  }
  func.func @transform_7(%arg0: i32) -> (i32, i32) {
    %c0_i32 = arith.constant 0 : i32
    %c0_i32_0 = arith.constant 0 : i32
    return %arg0, %c0_i32 : i32, i32
  }
}

</mosaic_0001>

<llo_original>
// kernel: dqn_forward.1
$region0: #{dqn_forward.1}
  #allocation0 [shape = 'u32[]', space=smem, size = 0x4, offset = 0x4, fixed_abs, tag = 'smem constant byte address 0x4 - core index']
  #allocation1 [shape = 'u32[72,128]{1,0:T(1,128)}', space=vmem, size = 0x9000, scoped, tag = 'internal scratch']
  %s0 = inlined_call_operand.vmem [shape: f32[8,128], index: 0, kind: input, shape index: {}]
  %s1 = inlined_call_operand.vmem [shape: bf16[128,128], index: 1, kind: input, shape index: {}]
  %s2 = inlined_call_operand.vmem [shape: f32[1,128], index: 2, kind: input, shape index: {}]
  %s3 = inlined_call_operand.vmem [shape: bf16[128,128], index: 3, kind: input, shape index: {}]
  %s4 = inlined_call_operand.vmem [shape: f32[1,128], index: 4, kind: input, shape index: {}]
  %s5 = inlined_call_operand.vmem [shape: bf16[128,128], index: 5, kind: input, shape index: {}]
  %s6 = inlined_call_operand.vmem [shape: f32[1,128], index: 6, kind: input, shape index: {}]
  %s7 = inlined_call_operand.vmem [shape: f32[8,128], index: 7, kind: output, shape index: {}]
  %s8 = sld [smem:[#allocation0]]
  $region38: #{dqn_forward.1} parent=0
    _
  %s10 = ssub.s32 1, %s8
  %s11 = scalar_select 0, %s10, %s8
  // Predicated region
  $region2: #{dqn_forward.1} parent=0 // pred_check
    _
  $region3: #{dqn_forward.1} parent=0 // pred_check_branch
    %13 = sbr.rel (0) target = $region5
  $region4: #{dqn_forward.1} parent=0 // pred_region
    _
  $region5: #{dqn_forward.1} parent=0 // pred_fallthru
    _
  // Predicated region
  $region6: #{dqn_forward.1} parent=0 // pred_check
    _
  $region7: #{dqn_forward.1} parent=0 // pred_check_branch
    %15 = sbr.rel (0) target = $region9
  $region8: #{dqn_forward.1} parent=0 // pred_region
    _
  $region9: #{dqn_forward.1} parent=0 // pred_fallthru
    _
  // Predicated region
  $region10: #{dqn_forward.1} parent=0 // pred_check
    _
  $region11: #{dqn_forward.1} parent=0 // pred_check_branch
    %17 = sbr.rel (0) target = $region13
  $region12: #{dqn_forward.1} parent=0 // pred_region
    _
  $region13: #{dqn_forward.1} parent=0 // pred_fallthru
    _
  // Predicated region
  $region14: #{dqn_forward.1} parent=0 // pred_check
    _
  $region15: #{dqn_forward.1} parent=0 // pred_check_branch
    %19 = sbr.rel (0) target = $region17
  $region16: #{dqn_forward.1} parent=0 // pred_region
    _
  $region17: #{dqn_forward.1} parent=0 // pred_fallthru
    _
  // Predicated region
  $region18: #{dqn_forward.1} parent=0 // pred_check
    _
  $region19: #{dqn_forward.1} parent=0 // pred_check_branch
    %21 = sbr.rel (0) target = $region21
  $region20: #{dqn_forward.1} parent=0 // pred_region
    _
  $region21: #{dqn_forward.1} parent=0 // pred_fallthru
    _
  // Predicated region
  $region22: #{dqn_forward.1} parent=0 // pred_check
    _
  $region23: #{dqn_forward.1} parent=0 // pred_check_branch
    %23 = sbr.rel (0) target = $region25
  $region24: #{dqn_forward.1} parent=0 // pred_region
    _
  $region25: #{dqn_forward.1} parent=0 // pred_fallthru
    _
  // Predicated region
  $region26: #{dqn_forward.1} parent=0 // pred_check
    _
  $region27: #{dqn_forward.1} parent=0 // pred_check_branch
    %25 = sbr.rel (0) target = $region29
  $region28: #{dqn_forward.1} parent=0 // pred_region
    _
  $region29: #{dqn_forward.1} parent=0 // pred_fallthru
    _
  %v26 = vld [vmem:[%s0] sm:$0xff]
  %v27 = vpack.c.bf16 %v26, %v26
  %v28 = vld [vmem:[%s1] sm:$0xf]
  %v29 = vld [vmem:[%s1 + $0x4] sm:$0xf]
  %v30 = vld [vmem:[%s1 + $0x8] sm:$0xf]
  %v31 = vld [vmem:[%s1 + $0xc] sm:$0xf]
  %v32 = vld [vmem:[%s1 + $0x10] sm:$0xf]
  %v33 = vld [vmem:[%s1 + $0x14] sm:$0xf]
  %v34 = vld [vmem:[%s1 + $0x18] sm:$0xf]
  %v35 = vld [vmem:[%s1 + $0x1c] sm:$0xf]
  %v36 = vld [vmem:[%s1 + $0x20] sm:$0xf]
  %v37 = vld [vmem:[%s1 + $0x24] sm:$0xf]
  %v38 = vld [vmem:[%s1 + $0x28] sm:$0xf]
  %v39 = vld [vmem:[%s1 + $0x2c] sm:$0xf]
  %v40 = vld [vmem:[%s1 + $0x30] sm:$0xf]
  %v41 = vld [vmem:[%s1 + $0x34] sm:$0xf]
  %v42 = vld [vmem:[%s1 + $0x38] sm:$0xf]
  %v43 = vld [vmem:[%s1 + $0x3c] sm:$0xf]
  %v44 = vld [vmem:[%s2] sm:$0x1]
  %v46 = vperm.slane %v44, 0
  %v64 = vunpack.c.l.b16 %v28
  %v65 = vunpack.c.l.b16 %v29
  %v66 = vunpack.c.l.b16 %v30
  %v67 = vunpack.c.l.b16 %v31
  %v68 = vunpack.c.l.b16 %v32
  %v69 = vunpack.c.l.b16 %v33
  %v70 = vunpack.c.l.b16 %v34
  %v71 = vunpack.c.l.b16 %v35
  %v72 = vunpack.c.l.b16 %v36
  %v73 = vunpack.c.l.b16 %v37
  %v74 = vunpack.c.l.b16 %v38
  %v75 = vunpack.c.l.b16 %v39
  %v76 = vunpack.c.l.b16 %v40
  %v77 = vunpack.c.l.b16 %v41
  %v78 = vunpack.c.l.b16 %v42
  %v79 = vunpack.c.l.b16 %v43
  %v80 = vpack.c.b16 %v65, %v64
  %v81 = vpack.c.b16 %v67, %v66
  %v82 = vpack.c.b16 %v69, %v68
  %v83 = vpack.c.b16 %v71, %v70
  %v84 = vpack.c.b16 %v73, %v72
  %v85 = vpack.c.b16 %v75, %v74
  %v86 = vpack.c.b16 %v77, %v76
  %v87 = vpack.c.b16 %v79, %v78
  %96 = vmatpush.bf16.msra.mxu0 %v87
  %97 = vmatpush.bf16.msra.mxu0 %v86
  %98 = vmatpush.bf16.msra.mxu0 %v85
  %99 = vmatpush.bf16.msra.mxu0 %v84
  %100 = vmatpush.bf16.msra.mxu0 %v83
  %101 = vmatpush.bf16.msra.mxu0 %v82
  %102 = vmatpush.bf16.msra.mxu0 %v81
  %103 = vmatpush.bf16.msra.mxu0 %v80
  %104 = vmatmul.bf16.gmra.mxu0 %v27
  %v105 = vpop.f32.mrf.mxu0
  %v106 = vadd.f32 %v46, %v105
  %v107 = vpop.f32.mrf.mxu0
  %108 = vdwg.mxu0
  %v109 = vmax.f32 %v106, 0.0
  %v110 = vpack.c.bf16 %v109, %v109
  %v111 = vld [vmem:[%s3] sm:$0xf]
  %v112 = vld [vmem:[%s3 + $0x4] sm:$0xf]
  %v113 = vld [vmem:[%s3 + $0x8] sm:$0xf]
  %v114 = vld [vmem:[%s3 + $0xc] sm:$0xf]
  %v115 = vld [vmem:[%s3 + $0x10] sm:$0xf]
  %v116 = vld [vmem:[%s3 + $0x14] sm:$0xf]
  %v117 = vld [vmem:[%s3 + $0x18] sm:$0xf]
  %v118 = vld [vmem:[%s3 + $0x1c] sm:$0xf]
  %v119 = vld [vmem:[%s3 + $0x20] sm:$0xf]
  %v120 = vld [vmem:[%s3 + $0x24] sm:$0xf]
  %v121 = vld [vmem:[%s3 + $0x28] sm:$0xf]
  %v122 = vld [vmem:[%s3 + $0x2c] sm:$0xf]
  %v123 = vld [vmem:[%s3 + $0x30] sm:$0xf]
  %v124 = vld [vmem:[%s3 + $0x34] sm:$0xf]
  %v125 = vld [vmem:[%s3 + $0x38] sm:$0xf]
  %v126 = vld [vmem:[%s3 + $0x3c] sm:$0xf]
  %v127 = vld [vmem:[%s4] sm:$0x1]
  %v129 = vperm.slane %v127, 0
  %v147 = vunpack.c.l.b16 %v111
  %v148 = vunpack.c.l.b16 %v112
  %v149 = vunpack.c.l.b16 %v113
  %v150 = vunpack.c.l.b16 %v114
  %v151 = vunpack.c.l.b16 %v115
  %v152 = vunpack.c.l.b16 %v116
  %v153 = vunpack.c.l.b16 %v117
  %v154 = vunpack.c.l.b16 %v118
  %v155 = vunpack.c.l.b16 %v119
  %v156 = vunpack.c.l.b16 %v120
  %v157 = vunpack.c.l.b16 %v121
  %v158 = vunpack.c.l.b16 %v122
  %v159 = vunpack.c.l.b16 %v123
  %v160 = vunpack.c.l.b16 %v124
  %v161 = vunpack.c.l.b16 %v125
  %v162 = vunpack.c.l.b16 %v126
  %v163 = vpack.c.b16 %v148, %v147
  %v164 = vpack.c.b16 %v150, %v149
  %v165 = vpack.c.b16 %v152, %v151
  %v166 = vpack.c.b16 %v154, %v153
  %v167 = vpack.c.b16 %v156, %v155
  %v168 = vpack.c.b16 %v158, %v157
  %v169 = vpack.c.b16 %v160, %v159
  %v170 = vpack.c.b16 %v162, %v161
  %179 = vmatpush.bf16.msra.mxu0 %v170
  %180 = vmatpush.bf16.msra.mxu0 %v169
  %181 = vmatpush.bf16.msra.mxu0 %v168
  %182 = vmatpush.bf16.msra.mxu0 %v167
  %183 = vmatpush.bf16.msra.mxu0 %v166
  %184 = vmatpush.bf16.msra.mxu0 %v165
  %185 = vmatpush.bf16.msra.mxu0 %v164
  %186 = vmatpush.bf16.msra.mxu0 %v163
  %187 = vmatmul.bf16.gmra.mxu0 %v110
  %v188 = vpop.f32.mrf.mxu0
  %v189 = vadd.f32 %v129, %v188
  %v190 = vpop.f32.mrf.mxu0
  %191 = vdwg.mxu0
  %v192 = vmax.f32 %v189, 0.0
  %v193 = vpack.c.bf16 %v192, %v192
  %v194 = vld [vmem:[%s5] sm:$0xf]
  %v195 = vld [vmem:[%s5 + $0x4] sm:$0xf]
  %v196 = vld [vmem:[%s5 + $0x8] sm:$0xf]
  %v197 = vld [vmem:[%s5 + $0xc] sm:$0xf]
  %v198 = vld [vmem:[%s5 + $0x10] sm:$0xf]
  %v199 = vld [vmem:[%s5 + $0x14] sm:$0xf]
  %v200 = vld [vmem:[%s5 + $0x18] sm:$0xf]
  %v201 = vld [vmem:[%s5 + $0x1c] sm:$0xf]
  %v202 = vld [vmem:[%s5 + $0x20] sm:$0xf]
  %v203 = vld [vmem:[%s5 + $0x24] sm:$0xf]
  %v204 = vld [vmem:[%s5 + $0x28] sm:$0xf]
  %v205 = vld [vmem:[%s5 + $0x2c] sm:$0xf]
  %v206 = vld [vmem:[%s5 + $0x30] sm:$0xf]
  %v207 = vld [vmem:[%s5 + $0x34] sm:$0xf]
  %v208 = vld [vmem:[%s5 + $0x38] sm:$0xf]
  %v209 = vld [vmem:[%s5 + $0x3c] sm:$0xf]
  %v210 = vld [vmem:[%s6] sm:$0x1]
  %v212 = vperm.slane %v210, 0
  %v230 = vunpack.c.l.b16 %v194
  %v231 = vunpack.c.l.b16 %v195
  %v232 = vunpack.c.l.b16 %v196
  %v233 = vunpack.c.l.b16 %v197
  %v234 = vunpack.c.l.b16 %v198
  %v235 = vunpack.c.l.b16 %v199
  %v236 = vunpack.c.l.b16 %v200
  %v237 = vunpack.c.l.b16 %v201
  %v238 = vunpack.c.l.b16 %v202
  %v239 = vunpack.c.l.b16 %v203
  %v240 = vunpack.c.l.b16 %v204
  %v241 = vunpack.c.l.b16 %v205
  %v242 = vunpack.c.l.b16 %v206
  %v243 = vunpack.c.l.b16 %v207
  %v244 = vunpack.c.l.b16 %v208
  %v245 = vunpack.c.l.b16 %v209
  %v246 = vpack.c.b16 %v231, %v230
  %v247 = vpack.c.b16 %v233, %v232
  %v248 = vpack.c.b16 %v235, %v234
  %v249 = vpack.c.b16 %v237, %v236
  %v250 = vpack.c.b16 %v239, %v238
  %v251 = vpack.c.b16 %v241, %v240
  %v252 = vpack.c.b16 %v243, %v242
  %v253 = vpack.c.b16 %v245, %v244
  %262 = vmatpush.bf16.msra.mxu0 %v253
  %263 = vmatpush.bf16.msra.mxu0 %v252
  %264 = vmatpush.bf16.msra.mxu0 %v251
  %265 = vmatpush.bf16.msra.mxu0 %v250
  %266 = vmatpush.bf16.msra.mxu0 %v249
  %267 = vmatpush.bf16.msra.mxu0 %v248
  %268 = vmatpush.bf16.msra.mxu0 %v247
  %269 = vmatpush.bf16.msra.mxu0 %v246
  %270 = vmatmul.bf16.gmra.mxu0 %v193
  %v271 = vpop.f32.mrf.mxu0
  %v272 = vadd.f32 %v212, %v271
  %v273 = vpop.f32.mrf.mxu0
  %274 = vdwg.mxu0
  %275 = vst [vmem:[%s7] sm:$0xff] %v272
  // Predicated region
  $region30: #{dqn_forward.1} parent=0 // pred_check
    _
  $region31: #{dqn_forward.1} parent=0 // pred_check_branch
    %277 = sbr.rel (0) target = $region33
  $region32: #{dqn_forward.1} parent=0 // pred_region
    _
  $region33: #{dqn_forward.1} parent=0 // pred_fallthru
    _
  // Predicated region
  $region34: #{dqn_forward.1} parent=0 // pred_check
    _
  $region35: #{dqn_forward.1} parent=0 // pred_check_branch
    %279 = sbr.rel (0) target = $region37
  $region36: #{dqn_forward.1} parent=0 // pred_region
    _
  $region37: #{dqn_forward.1} parent=0 // pred_fallthru
    _

</llo_original>
